<compile_context>
chip_gen: v7x
topology: tpu7x:2x2x1
jax: 0.10.0
libtpu: 0.0.40
codegen_flags: <defaults>
</compile_context>

<pallas_src>
import jax
import jax.numpy as jnp
from jax import lax
from jax.experimental import pallas as pl
from jax.experimental.pallas import tpu as pltpu

_LANE = 128      # vreg lane width
_SUBLANE = 8     # f32 vreg sublane count
_HALO = 8        # sublane-aligned row halo; supports KH <= 9
_CHUNK = 16      # output rows per in-kernel sub-chunk (multiple of 8)


def _round_up(x: int, m: int) -> int:
    return (x + m - 1) // m * m


def _conv2d_valid_kernel(x_body_ref, x_halo_ref, w_ref, b_ref, o_ref, tail_ref):
    """One row tile of 'valid' cross-correlation, computed lane-dense.

    x_body_ref: (tm, wp)    input rows [i*tm, i*tm+tm)          (VMEM)
    x_halo_ref: (_HALO, wp) input rows just below the body      (VMEM)
    w_ref:      (KH, KW)    filter                              (SMEM)
    b_ref:      (1, 1)      bias                                (SMEM)
    o_ref:      (tm, wp)    output rows [i*tm, i*tm+tm)         (VMEM)
    tail_ref:   (24, wp)    tiny scratch for the last sub-chunk (VMEM)
    """
    tm, wp = o_ref.shape
    kh, kw = w_ref.shape
    rows = _CHUNK + _HALO            # rows in one haloed sub-chunk window
    n_chunks = tm // _CHUNK

    # Hoist the scalar taps and bias out of every loop (cheap SMEM reads).
    taps = [[w_ref[u, v] for v in range(kw)] for u in range(kh)]
    bias = b_ref[0, 0]

    def accum(xwin):
        # xwin: (rows, wp) haloed input rows for one _CHUNK-row output chunk.
        # Tap (u, v) is fetched with XLU rolls so every load stays aligned and
        # lane-dense; wrap-around only lands in clipped output rows/cols.
        acc = None
        for u in range(kh):
            if u == 0:
                xu = xwin[0:_CHUNK, :]
            else:
                xu = pltpu.roll(xwin, rows - u, axis=0)[0:_CHUNK, :]
            for v in range(kw):
                xs = xu if v == 0 else pltpu.roll(xu, wp - v, axis=1)
                term = xs * taps[u][v]
                acc = term if acc is None else acc + term
        return acc + bias

    # All chunks except the last read their haloed window straight out of the
    # body block (rows [c*CHUNK, c*CHUNK + CHUNK + HALO) <= tm). No scratch
    # round-trip; temporaries stay chunk-sized.
    def body_chunk(c, carry):
        r0 = pl.multiple_of(c * _CHUNK, _CHUNK)
        xwin = x_body_ref[pl.ds(r0, rows), :]
        o_ref[pl.ds(r0, _CHUNK), :] = accum(xwin)
        return carry

    lax.fori_loop(0, n_chunks - 1, body_chunk, 0)

    # Last chunk: stitch {last _CHUNK body rows, _HALO halo rows} into a tiny
    # (24, wp) window (negligible copy vs. the old full-tile scratch assembly).
    r0 = tm - _CHUNK
    tail_ref[0:_CHUNK, :] = x_body_ref[r0:tm, :]
    tail_ref[_CHUNK:rows, :] = x_halo_ref[...]
    o_ref[r0:tm, :] = accum(tail_ref[...])


def _vmem_limit_bytes() -> int:
    # v5e/v6e: 128 MiB VMEM per TensorCore; v7x: 64 MiB. Request half the
    # physical capacity, capped at 64 MiB (so <= 32 MiB on v7x).
    try:
        cap = int(pltpu.get_tpu_info().vmem_capacity_bytes)
    except Exception:
        cap = 64 * 1024 * 1024
    return min(max(cap // 2, 16 * 1024 * 1024), 64 * 1024 * 1024)


def scipy_conv2d_forward(x, filt, bias, *, tile_rows: int = 2048):
    """x: (H, W), filt: (KH, KW), bias: (1, 1) -> (H-KH+1, W-KW+1) float32."""
    x = jnp.asarray(x, jnp.float32)
    filt = jnp.asarray(filt, jnp.float32)
    bias = jnp.asarray(bias, jnp.float32).reshape(1, 1)

    H, W = x.shape
    KH, KW = filt.shape
    if H < KH or W < KW:
        raise ValueError("image smaller than filter")
    if KH - 1 > _HALO:
        raise ValueError(f"filter height must be <= {_HALO + 1}")
    OH, OW = H - KH + 1, W - KW + 1

    # Lane-dense block width; arrays themselves are NOT padded (Pallas handles
    # the partial edge blocks in both rows and lanes).
    wp = _round_up(W, _LANE)
    # TODO(synk): lane-pack several independent row strips per 128-lane vreg
    # when W + KW - 1 << 128 to recover the wasted lanes on narrow images.

    vmem_limit = _vmem_limit_bytes()
    budget = (vmem_limit * 3) // 4
    # Double-buffered body + out blocks (4*tm rows), double-buffered halo, plus
    # a safety allowance of several chunk-sized temporaries / tail scratch.
    tm_budget = (budget // (4 * wp) - 2 * _HALO - 8 * (_CHUNK + _HALO)) // 4
    tm_budget = max(_CHUNK, (tm_budget // _CHUNK) * _CHUNK)

    # Keep >= 2 row tiles on tall images so both v7x TensorCores (and the grid
    # pipeline) get work; the extra grid step is negligible on v5e/v6e.
    if OH >= 2 * _CHUNK:
        tm_cap = _round_up((OH + 1) // 2, _CHUNK)
    else:
        tm_cap = _round_up(OH, _CHUNK)

    tm = max(_CHUNK, min(_round_up(tile_rows, _CHUNK), tm_budget, tm_cap))
    assert tm % _CHUNK == 0 and tm % _SUBLANE == 0
    n_tiles = (OH + tm - 1) // tm
    tm_blocks = tm // _SUBLANE
    halo_blk_max = (H - 1) // _SUBLANE   # last 8-row block that starts in-bounds

    grid_spec = pltpu.PrefetchScalarGridSpec(
        num_scalar_prefetch=0,
        grid=(n_tiles,),
        in_specs=[
            # Body rows [i*tm, i*tm + tm); partial edge block allowed.
            pl.BlockSpec((tm, wp), lambda i: (i, 0)),
            # Halo rows [(i+1)*tm, (i+1)*tm + 8), clamped in-bounds; a clamped
            # halo only feeds output rows that get masked off at writeback.
            pl.BlockSpec(
                (_HALO, wp),
                lambda i: (jnp.minimum((i + 1) * tm_blocks, halo_blk_max), 0)),
            # Small parameters in SMEM for cheap scalar reads.
            pl.BlockSpec(memory_space=pltpu.MemorySpace.SMEM),   # filter
            pl.BlockSpec(memory_space=pltpu.MemorySpace.SMEM),   # bias
        ],
        out_specs=pl.BlockSpec((tm, wp), lambda i: (i, 0)),
        scratch_shapes=[pltpu.VMEM((_CHUNK + _HALO, wp), jnp.float32)],
    )

    return pl.pallas_call(
        _conv2d_valid_kernel,
        out_shape=jax.ShapeDtypeStruct((OH, OW), jnp.float32),
        grid_spec=grid_spec,
        compiler_params=pltpu.CompilerParams(
            dimension_semantics=("parallel",),   # independent row tiles
            vmem_limit_bytes=vmem_limit,
        ),
    )(x, x, filt, bias)


def _reference(x, filt, bias):
    # Pure-JAX 'valid' cross-correlation reference.
    H, W = x.shape
    KH, KW = filt.shape
    OH, OW = H - KH + 1, W - KW + 1
    out = jnp.zeros((OH, OW), jnp.float32)
    for u in range(KH):
        for v in range(KW):
            out = out + x[u:u + OH, v:v + OW] * filt[u, v]
    return out + bias[0, 0]


if __name__ == "__main__":
    key = jax.random.PRNGKey(0)
    k_x, k_w, k_b = jax.random.split(key, 3)

    # Matches the module's example: a plain 2-D image, ScipyConv2d(3, 3).
    H, W = 20, 20
    KH, KW = 3, 3
    x = jax.random.normal(k_x, (H, W), dtype=jnp.float32)
    filt = jax.random.normal(k_w, (KH, KW), dtype=jnp.float32)   # Parameter(randn(KH, KW))
    bias = jax.random.normal(k_b, (1, 1), dtype=jnp.float32)     # Parameter(randn(1, 1))

    out = jax.block_until_ready(scipy_conv2d_forward(x, filt, bias))
    ref = _reference(x, filt, bias)
    assert out.shape == (H - KH + 1, W - KW + 1)
    assert jnp.allclose(out, ref, atol=1e-5, rtol=1e-5), float(
        jnp.max(jnp.abs(out - ref)))

    # Second shape exercises: multi-tile grid + halo across tiles, multi-chunk
    # fori_loop, and masked partial edge blocks in both rows and lanes.
    H2, W2 = 150, 200
    x2 = jax.random.normal(k_x, (H2, W2), dtype=jnp.float32)
    out2 = jax.block_until_ready(scipy_conv2d_forward(x2, filt, bias))
    ref2 = _reference(x2, filt, bias)
    assert out2.shape == (H2 - KH + 1, W2 - KW + 1)
    assert jnp.allclose(out2, ref2, atol=1e-4, rtol=1e-4), float(
        jnp.max(jnp.abs(out2 - ref2)))

    print("KERNEL_OK")
</pallas_src>

<mosaic_0001>
module attributes {stable_mosaic.version = 11 : i64} {
  func.func @_conv2d_valid_kernel(%arg0: i32, %arg1: memref<32x128xf32, #tpu.memory_space<vmem>>, %arg2: memref<8x128xf32, #tpu.memory_space<vmem>>, %arg3: memref<3x3xf32, #tpu.memory_space<smem>>, %arg4: memref<1x1xf32, #tpu.memory_space<smem>>, %arg5: memref<32x128xf32, #tpu.memory_space<vmem>>, %arg6: memref<24x128xf32, #tpu.memory_space<vmem>>) attributes {dimension_semantics = [#tpu.dimension_semantics<parallel>], iteration_bounds = array<i64: 1>, scalar_prefetch = 0 : i64, scratch_operands = 1 : i64, tpu.core_type = #tpu.core_type<tc>, window_params = [{transform_indices = @transform_0, window_bounds = array<i64: 32, 128>}, {transform_indices = @transform_1, window_bounds = array<i64: 8, 128>}, {transform_indices = @transform_2, window_bounds = array<i64: 3, 3>}, {transform_indices = @transform_3, window_bounds = array<i64: 1, 1>}, {transform_indices = @transform_4, window_bounds = array<i64: 32, 128>}]} {
    %c0 = arith.constant 0 : index
    %c0_0 = arith.constant 0 : index
    %0 = memref.load %arg3[%c0, %c0_0] : memref<3x3xf32, #tpu.memory_space<smem>>
    %c0_1 = arith.constant 0 : index
    %c1 = arith.constant 1 : index
    %1 = memref.load %arg3[%c0_1, %c1] : memref<3x3xf32, #tpu.memory_space<smem>>
    %c0_2 = arith.constant 0 : index
    %c2 = arith.constant 2 : index
    %2 = memref.load %arg3[%c0_2, %c2] : memref<3x3xf32, #tpu.memory_space<smem>>
    %c1_3 = arith.constant 1 : index
    %c0_4 = arith.constant 0 : index
    %3 = memref.load %arg3[%c1_3, %c0_4] : memref<3x3xf32, #tpu.memory_space<smem>>
    %c1_5 = arith.constant 1 : index
    %c1_6 = arith.constant 1 : index
    %4 = memref.load %arg3[%c1_5, %c1_6] : memref<3x3xf32, #tpu.memory_space<smem>>
    %c1_7 = arith.constant 1 : index
    %c2_8 = arith.constant 2 : index
    %5 = memref.load %arg3[%c1_7, %c2_8] : memref<3x3xf32, #tpu.memory_space<smem>>
    %c2_9 = arith.constant 2 : index
    %c0_10 = arith.constant 0 : index
    %6 = memref.load %arg3[%c2_9, %c0_10] : memref<3x3xf32, #tpu.memory_space<smem>>
    %c2_11 = arith.constant 2 : index
    %c1_12 = arith.constant 1 : index
    %7 = memref.load %arg3[%c2_11, %c1_12] : memref<3x3xf32, #tpu.memory_space<smem>>
    %c2_13 = arith.constant 2 : index
    %c2_14 = arith.constant 2 : index
    %8 = memref.load %arg3[%c2_13, %c2_14] : memref<3x3xf32, #tpu.memory_space<smem>>
    %c0_15 = arith.constant 0 : index
    %c0_16 = arith.constant 0 : index
    %9 = memref.load %arg4[%c0_15, %c0_16] : memref<1x1xf32, #tpu.memory_space<smem>>
    %c0_i32 = arith.constant 0 : i32
    %c16_i32 = arith.constant 16 : i32
    %10 = arith.muli %c0_i32, %c16_i32 : i32
    %11 = tpu.assume_multiple %10, 16 : i32
    %12 = arith.index_cast %11 : i32 to index
    %c0_17 = arith.constant 0 : index
    %13 = vector.load %arg1[%12, %c0_17] : memref<32x128xf32, #tpu.memory_space<vmem>>, vector<24x128xf32>
    %14 = vector.extract_strided_slice %13 {offsets = [0, 0], sizes = [16, 128], strides = [1, 1]} : vector<24x128xf32> to vector<16x128xf32>
    %15 = vector.broadcast %0 : f32 to vector<16x128xf32>
    %16 = arith.mulf %14, %15 : vector<16x128xf32>
    %c127_i32 = arith.constant 127 : i32
    %17 = tpu.dynamic_rotate %14 by %c127_i32 dim 1 : vector<16x128xf32>, i32 -> vector<16x128xf32>
    %18 = vector.broadcast %1 : f32 to vector<16x128xf32>
    %19 = arith.mulf %17, %18 : vector<16x128xf32>
    %20 = arith.addf %16, %19 : vector<16x128xf32>
    %c126_i32 = arith.constant 126 : i32
    %21 = tpu.dynamic_rotate %14 by %c126_i32 dim 1 : vector<16x128xf32>, i32 -> vector<16x128xf32>
    %22 = vector.broadcast %2 : f32 to vector<16x128xf32>
    %23 = arith.mulf %21, %22 : vector<16x128xf32>
    %24 = arith.addf %20, %23 : vector<16x128xf32>
    %c23_i32 = arith.constant 23 : i32
    %25 = tpu.dynamic_rotate %13 by %c23_i32 dim 0 : vector<24x128xf32>, i32 -> vector<24x128xf32>
    %26 = vector.extract_strided_slice %25 {offsets = [0, 0], sizes = [16, 128], strides = [1, 1]} : vector<24x128xf32> to vector<16x128xf32>
    %27 = vector.broadcast %3 : f32 to vector<16x128xf32>
    %28 = arith.mulf %26, %27 : vector<16x128xf32>
    %29 = arith.addf %24, %28 : vector<16x128xf32>
    %c127_i32_18 = arith.constant 127 : i32
    %30 = tpu.dynamic_rotate %26 by %c127_i32_18 dim 1 : vector<16x128xf32>, i32 -> vector<16x128xf32>
    %31 = vector.broadcast %4 : f32 to vector<16x128xf32>
    %32 = arith.mulf %30, %31 : vector<16x128xf32>
    %33 = arith.addf %29, %32 : vector<16x128xf32>
    %c126_i32_19 = arith.constant 126 : i32
    %34 = tpu.dynamic_rotate %26 by %c126_i32_19 dim 1 : vector<16x128xf32>, i32 -> vector<16x128xf32>
    %35 = vector.broadcast %5 : f32 to vector<16x128xf32>
    %36 = arith.mulf %34, %35 : vector<16x128xf32>
    %37 = arith.addf %33, %36 : vector<16x128xf32>
    %c22_i32 = arith.constant 22 : i32
    %38 = tpu.dynamic_rotate %13 by %c22_i32 dim 0 : vector<24x128xf32>, i32 -> vector<24x128xf32>
    %39 = vector.extract_strided_slice %38 {offsets = [0, 0], sizes = [16, 128], strides = [1, 1]} : vector<24x128xf32> to vector<16x128xf32>
    %40 = vector.broadcast %6 : f32 to vector<16x128xf32>
    %41 = arith.mulf %39, %40 : vector<16x128xf32>
    %42 = arith.addf %37, %41 : vector<16x128xf32>
    %c127_i32_20 = arith.constant 127 : i32
    %43 = tpu.dynamic_rotate %39 by %c127_i32_20 dim 1 : vector<16x128xf32>, i32 -> vector<16x128xf32>
    %44 = vector.broadcast %7 : f32 to vector<16x128xf32>
    %45 = arith.mulf %43, %44 : vector<16x128xf32>
    %46 = arith.addf %42, %45 : vector<16x128xf32>
    %c126_i32_21 = arith.constant 126 : i32
    %47 = tpu.dynamic_rotate %39 by %c126_i32_21 dim 1 : vector<16x128xf32>, i32 -> vector<16x128xf32>
    %48 = vector.broadcast %8 : f32 to vector<16x128xf32>
    %49 = arith.mulf %47, %48 : vector<16x128xf32>
    %50 = arith.addf %46, %49 : vector<16x128xf32>
    %51 = vector.broadcast %9 : f32 to vector<16x128xf32>
    %52 = arith.addf %50, %51 : vector<16x128xf32>
    %53 = arith.index_cast %11 : i32 to index
    %c0_22 = arith.constant 0 : index
    %54 = vector.load %arg5[%53, %c0_22] : memref<32x128xf32, #tpu.memory_space<vmem>>, vector<16x128xf32>
    tpu.vector_store %arg5[%53, %c0_22], %52 {strides = array<i32>} : memref<32x128xf32, #tpu.memory_space<vmem>>, vector<16x128xf32>,
    %c1_i32 = arith.constant 1 : i32
    %c16 = arith.constant 16 : index
    %c0_23 = arith.constant 0 : index
    %55 = vector.load %arg1[%c16, %c0_23] : memref<32x128xf32, #tpu.memory_space<vmem>>, vector<16x128xf32>
    %c0_24 = arith.constant 0 : index
    %c0_25 = arith.constant 0 : index
    %56 = vector.load %arg6[%c0_24, %c0_25] : memref<24x128xf32, #tpu.memory_space<vmem>>, vector<16x128xf32>
    tpu.vector_store %arg6[%c0_24, %c0_25], %55 {strides = array<i32>} : memref<24x128xf32, #tpu.memory_space<vmem>>, vector<16x128xf32>,
    %c0_26 = arith.constant 0 : index
    %c0_27 = arith.constant 0 : index
    %57 = vector.load %arg2[%c0_26, %c0_27] : memref<8x128xf32, #tpu.memory_space<vmem>>, vector<8x128xf32>
    %c16_28 = arith.constant 16 : index
    %c0_29 = arith.constant 0 : index
    %58 = vector.load %arg6[%c16_28, %c0_29] : memref<24x128xf32, #tpu.memory_space<vmem>>, vector<8x128xf32>
    tpu.vector_store %arg6[%c16_28, %c0_29], %57 {strides = array<i32>} : memref<24x128xf32, #tpu.memory_space<vmem>>, vector<8x128xf32>,
    %c0_30 = arith.constant 0 : index
    %c0_31 = arith.constant 0 : index
    %59 = vector.load %arg6[%c0_30, %c0_31] : memref<24x128xf32, #tpu.memory_space<vmem>>, vector<24x128xf32>
    %60 = vector.extract_strided_slice %59 {offsets = [0, 0], sizes = [16, 128], strides = [1, 1]} : vector<24x128xf32> to vector<16x128xf32>
    %61 = vector.broadcast %0 : f32 to vector<16x128xf32>
    %62 = arith.mulf %60, %61 : vector<16x128xf32>
    %c127_i32_32 = arith.constant 127 : i32
    %63 = tpu.dynamic_rotate %60 by %c127_i32_32 dim 1 : vector<16x128xf32>, i32 -> vector<16x128xf32>
    %64 = vector.broadcast %1 : f32 to vector<16x128xf32>
    %65 = arith.mulf %63, %64 : vector<16x128xf32>
    %66 = arith.addf %62, %65 : vector<16x128xf32>
    %c126_i32_33 = arith.constant 126 : i32
    %67 = tpu.dynamic_rotate %60 by %c126_i32_33 dim 1 : vector<16x128xf32>, i32 -> vector<16x128xf32>
    %68 = vector.broadcast %2 : f32 to vector<16x128xf32>
    %69 = arith.mulf %67, %68 : vector<16x128xf32>
    %70 = arith.addf %66, %69 : vector<16x128xf32>
    %c23_i32_34 = arith.constant 23 : i32
    %71 = tpu.dynamic_rotate %59 by %c23_i32_34 dim 0 : vector<24x128xf32>, i32 -> vector<24x128xf32>
    %72 = vector.extract_strided_slice %71 {offsets = [0, 0], sizes = [16, 128], strides = [1, 1]} : vector<24x128xf32> to vector<16x128xf32>
    %73 = vector.broadcast %3 : f32 to vector<16x128xf32>
    %74 = arith.mulf %72, %73 : vector<16x128xf32>
    %75 = arith.addf %70, %74 : vector<16x128xf32>
    %c127_i32_35 = arith.constant 127 : i32
    %76 = tpu.dynamic_rotate %72 by %c127_i32_35 dim 1 : vector<16x128xf32>, i32 -> vector<16x128xf32>
    %77 = vector.broadcast %4 : f32 to vector<16x128xf32>
    %78 = arith.mulf %76, %77 : vector<16x128xf32>
    %79 = arith.addf %75, %78 : vector<16x128xf32>
    %c126_i32_36 = arith.constant 126 : i32
    %80 = tpu.dynamic_rotate %72 by %c126_i32_36 dim 1 : vector<16x128xf32>, i32 -> vector<16x128xf32>
    %81 = vector.broadcast %5 : f32 to vector<16x128xf32>
    %82 = arith.mulf %80, %81 : vector<16x128xf32>
    %83 = arith.addf %79, %82 : vector<16x128xf32>
    %c22_i32_37 = arith.constant 22 : i32
    %84 = tpu.dynamic_rotate %59 by %c22_i32_37 dim 0 : vector<24x128xf32>, i32 -> vector<24x128xf32>
    %85 = vector.extract_strided_slice %84 {offsets = [0, 0], sizes = [16, 128], strides = [1, 1]} : vector<24x128xf32> to vector<16x128xf32>
    %86 = vector.broadcast %6 : f32 to vector<16x128xf32>
    %87 = arith.mulf %85, %86 : vector<16x128xf32>
    %88 = arith.addf %83, %87 : vector<16x128xf32>
    %c127_i32_38 = arith.constant 127 : i32
    %89 = tpu.dynamic_rotate %85 by %c127_i32_38 dim 1 : vector<16x128xf32>, i32 -> vector<16x128xf32>
    %90 = vector.broadcast %7 : f32 to vector<16x128xf32>
    %91 = arith.mulf %89, %90 : vector<16x128xf32>
    %92 = arith.addf %88, %91 : vector<16x128xf32>
    %c126_i32_39 = arith.constant 126 : i32
    %93 = tpu.dynamic_rotate %85 by %c126_i32_39 dim 1 : vector<16x128xf32>, i32 -> vector<16x128xf32>
    %94 = vector.broadcast %8 : f32 to vector<16x128xf32>
    %95 = arith.mulf %93, %94 : vector<16x128xf32>
    %96 = arith.addf %92, %95 : vector<16x128xf32>
    %97 = vector.broadcast %9 : f32 to vector<16x128xf32>
    %98 = arith.addf %96, %97 : vector<16x128xf32>
    %c16_40 = arith.constant 16 : index
    %c0_41 = arith.constant 0 : index
    %99 = vector.load %arg5[%c16_40, %c0_41] : memref<32x128xf32, #tpu.memory_space<vmem>>, vector<16x128xf32>
    tpu.vector_store %arg5[%c16_40, %c0_41], %98 {strides = array<i32>} : memref<32x128xf32, #tpu.memory_space<vmem>>, vector<16x128xf32>,
    return
  }
  func.func @transform_0(%arg0: i32) -> (i32, i32) {
    %c0_i32 = arith.constant 0 : i32
    %c0_i32_0 = arith.constant 0 : i32
    return %arg0, %c0_i32 : i32, i32
  }
  func.func @transform_1(%arg0: i32) -> (i32, i32) {
    %c1_i32 = arith.constant 1 : i32
    %0 = arith.addi %arg0, %c1_i32 : i32
    %c4_i32 = arith.constant 4 : i32
    %1 = arith.muli %0, %c4_i32 : i32
    %c2_i32 = arith.constant 2 : i32
    %2 = arith.minsi %1, %c2_i32 : i32
    %c0_i32 = arith.constant 0 : i32
    %c0_i32_0 = arith.constant 0 : i32
    return %2, %c0_i32 : i32, i32
  }
  func.func @transform_2(%arg0: i32) -> (i32, i32) {
    %c0_i32 = arith.constant 0 : i32
    %c0_i32_0 = arith.constant 0 : i32
    %c0_i32_1 = arith.constant 0 : i32
    return %c0_i32, %c0_i32_0 : i32, i32
  }
  func.func @transform_3(%arg0: i32) -> (i32, i32) {
    %c0_i32 = arith.constant 0 : i32
    %c0_i32_0 = arith.constant 0 : i32
    %c0_i32_1 = arith.constant 0 : i32
    return %c0_i32, %c0_i32_0 : i32, i32
  }
  func.func @transform_4(%arg0: i32) -> (i32, i32) {
    %c0_i32 = arith.constant 0 : i32
    %c0_i32_0 = arith.constant 0 : i32
    return %arg0, %c0_i32 : i32, i32
  }
}

</mosaic_0001>

<llo_original>
// kernel: tpu_custom_call.1
$region0: #{tpu_custom_call.1}
  #allocation0 [shape = 'u32[]', space=smem, size = 0x4, offset = 0x4, fixed_abs, tag = 'smem constant byte address 0x4 - core index']
  #allocation1 [shape = 'u32[144,128]{1,0:T(1,128)}', space=vmem, size = 0x12000, scoped, tag = 'internal scratch']
  #allocation2 [shape = 'f32[24,128]{1,0:T(8,128)}', space=vmem, size = 0x3000, scoped, tag = 'scratch operand']
  #allocation3 [shape = 'f32[1,1]{1,0:T(1,128)S(6)}', space=smem, size = 0x200, scoped, tag = 'scoped memory for tpu_custom_call.1']
  %s0 = inlined_call_operand.hbm [shape: f32[20,20], index: 0, kind: input, shape index: {}]
  %s1 = inlined_call_operand.hbm [shape: f32[20,20], index: 1, kind: input, shape index: {}]
  %s2 = inlined_call_operand.vmem [shape: f32[3,3], index: 2, kind: input, shape index: {}]
  %s3 = inlined_call_operand.<no memory space> [shape: f32[1,1], index: 3, kind: input, shape index: {}]
  %s4 = inlined_call_operand.hbm [shape: f32[18,18], index: 4, kind: output, shape index: {}]
  %s5 = sld [smem:[#allocation0]]
  $region38: #{tpu_custom_call.1} parent=0
    _
  %s7 = ssub.s32 1, %s5
  %s8 = scalar_select 0, %s7, %s5
  %9 = sst [smem:[#allocation3]] %s3
  $region1: #{tpu_custom_call.1} parent=0
    #allocation4 [shape = 'u8[16384]{0}', space=vmem, size = 0x4000, scoped, tag = 'input window, operand 0, single buffered']
    #allocation5 [shape = 's32[1]{0}', space=sflag, size = 0x4, scoped, tag = 'scoped memory for tpu_custom_call.1']
    #allocation6 [shape = 's32[1]{0}', space=sflag, size = 0x4, scoped, tag = 'scoped memory for tpu_custom_call.1']
    #allocation7 [shape = 's32[1]{0}', space=sflag, size = 0x4, scoped, tag = 'scoped memory for tpu_custom_call.1']
    #allocation8 [shape = 'u8[4096]{0}', space=vmem, size = 0x1000, scoped, tag = 'input window, operand 1, single buffered']
    #allocation9 [shape = 's32[1]{0}', space=sflag, size = 0x4, scoped, tag = 'scoped memory for tpu_custom_call.1']
    #allocation10 [shape = 'u8[2048]{0}', space=smem, size = 0x800, scoped, tag = 'input window, operand 2, single buffered']
    #allocation11 [shape = 'u8[16384]{0}', space=vmem, size = 0x4000, scoped, tag = 'output window, operand 0, single buffered']
    %10 = vsyncpa [#allocation5], 0
    %11 = vsyncpa [#allocation9], 0
    %12 = vsyncpa [#allocation7], 0
    %13 = vsyncpa [#allocation6], 0
    // Predicated region
    $region2: #{tpu_custom_call.1} parent=1 // pred_check
      _
    $region3: #{tpu_custom_call.1} parent=1 // pred_check_branch
      %15 = sbr.rel (0) target = $region5
    $region4: #{tpu_custom_call.1} parent=1 // pred_region
      %s17 = ssub.s32 512, 384
      %18 = vsyncadd [#allocation5], %s17
      %s19 = sshll.u32 [#allocation4], 4
      %s20 = int_to_ptr.vmem [resolvable:$true] %s19
      %25 = dma.hbm_to_vmem [thread:$0]  %s0, 384, %s20, [#allocation5], 128, 128, 8
    $region5: #{tpu_custom_call.1} parent=1 // pred_fallthru
      _
    // Predicated region
    $region6: #{tpu_custom_call.1} parent=1 // pred_check
      _
    $region7: #{tpu_custom_call.1} parent=1 // pred_check_branch
      %27 = sbr.rel (0) target = $region9
    $region8: #{tpu_custom_call.1} parent=1 // pred_region
      %s28 = sadd.s32 0, 1
      %s29 = smul.u32 %s28, 4
      %p30 = scmp.lt.s32.totalorder %s29, 2
      %s31 = scalar_select %p30, %s29, 2
      %s33 = ssub.s32 128, 128
      %34 = vsyncadd [#allocation9], %s33
      %s35 = smul.addr %s31, 128
      %s36 = scalar_lea.hbm %s1, %s35
      %s38 = sshll.u32 [#allocation8], 4
      %s39 = int_to_ptr.vmem [resolvable:$true] %s38
      %41 = dma.hbm_to_vmem [thread:$0]  %s36, 128, %s39, [#allocation9]
    $region9: #{tpu_custom_call.1} parent=1 // pred_fallthru
      _
    // Predicated region
    $region10: #{tpu_custom_call.1} parent=1 // pred_check
      _
    $region11: #{tpu_custom_call.1} parent=1 // pred_check_branch
      %43 = sbr.rel (0) target = $region13
    $region12: #{tpu_custom_call.1} parent=1 // pred_region
      %s45 = ssub.s32 64, 64
      %46 = vsyncadd [#allocation7], %s45
      %s48 = sshll.u32 %s2, 4
      %s49 = int_to_ptr.vmem [resolvable:$true] %s48
      %51 = dma.vmem_to_smem %s49, 64, [#allocation10], [#allocation7]
    $region13: #{tpu_custom_call.1} parent=1 // pred_fallthru
      _
    // Predicated region
    $region14: #{tpu_custom_call.1} parent=1 // pred_check
      _
    $region15: #{tpu_custom_call.1} parent=1 // pred_check_branch
      %53 = sbr.rel (0) target = $region17
    $region16: #{tpu_custom_call.1} parent=1 // pred_region
      _
    $region17: #{tpu_custom_call.1} parent=1 // pred_fallthru
      _
    // Predicated region
    $region18: #{tpu_custom_call.1} parent=1 // pred_check
      _
    $region19: #{tpu_custom_call.1} parent=1 // pred_check_branch
      %55 = sbr.rel (0) target = $region21
    $region20: #{tpu_custom_call.1} parent=1 // pred_region
      %56 = dma.done [#allocation5], 512
    $region21: #{tpu_custom_call.1} parent=1 // pred_fallthru
      _
    // Predicated region
    $region22: #{tpu_custom_call.1} parent=1 // pred_check
      _
    $region23: #{tpu_custom_call.1} parent=1 // pred_check_branch
      %58 = sbr.rel (0) target = $region25
    $region24: #{tpu_custom_call.1} parent=1 // pred_region
      %59 = dma.done [#allocation9], 128
    $region25: #{tpu_custom_call.1} parent=1 // pred_fallthru
      _
    // Predicated region
    $region26: #{tpu_custom_call.1} parent=1 // pred_check
      _
    $region27: #{tpu_custom_call.1} parent=1 // pred_check_branch
      %61 = sbr.rel (0) target = $region29
    $region28: #{tpu_custom_call.1} parent=1 // pred_region
      %62 = dma.done [#allocation7], 64
    $region29: #{tpu_custom_call.1} parent=1 // pred_fallthru
      _
    %63 = sfence
    %s64 = sadd.s32 0, 1
    %s65 = smul.u32 %s64, 4
    %p66 = scmp.lt.s32.totalorder %s65, 2
    %s67 = scalar_select %p66, %s65, 2
    %s68 = sld [smem:[#allocation10]]
    %s69 = sld [smem:[#allocation10 + $0x1]]
    %s70 = sld [smem:[#allocation10 + $0x2]]
    %s71 = sld [smem:[#allocation10 + $0x80]]
    %s72 = sld [smem:[#allocation10 + $0x81]]
    %s73 = sld [smem:[#allocation10 + $0x82]]
    %s74 = sld [smem:[#allocation10 + $0x100]]
    %s75 = sld [smem:[#allocation10 + $0x101]]
    %s76 = sld [smem:[#allocation10 + $0x102]]
    %s77 = sld [smem:[#allocation3]]
    %v78 = vld [vmem:[#allocation4] sm:$0xff]
    %v79 = vld [vmem:[#allocation4 + $0x8] sm:$0xff]
    %v80 = vld [vmem:[#allocation4 + $0x10] sm:$0xff]
    %v81 = vstv %s68
    %v82 = vmul.f32 %v78, %v81
    %v83 = vmul.f32 %v79, %v81
    %84 = vrot.lane.b32.xlu0 %v78, 127
    %v85 = vpop.permute.xlu0 %84
    %86 = vrot.lane.b32.xlu0 %v79, 127
    %v87 = vpop.permute.xlu0 %86
    %v88 = vstv %s69
    %v89 = vmul.f32 %v85, %v88
    %v90 = vmul.f32 %v87, %v88
    %v91 = vadd.f32 %v82, %v89
    %v92 = vadd.f32 %v83, %v90
    %93 = vrot.lane.b32.xlu0 %v78, 126
    %v94 = vpop.permute.xlu0 %93
    %95 = vrot.lane.b32.xlu0 %v79, 126
    %v96 = vpop.permute.xlu0 %95
    %v97 = vstv %s70
    %v98 = vmul.f32 %v94, %v97
    %v99 = vmul.f32 %v96, %v97
    %v100 = vadd.f32 %v91, %v98
    %v101 = vadd.f32 %v92, %v99
    %v102 = vrot.slane %v78, 1
    %v103 = vrot.slane %v79, 1
    %v104 = vrot.slane %v80, 1
    %v105 = vlaneseq
    %v106 = vshrl.u32 %v105, 7
    %vm107 = vcmp.lt.s32.totalorder %v106, 7
    %v108 = vsel %vm107, %v103, %v104
    %v109 = vsel %vm107, %v102, %v103
    %v110 = vstv %s71
    %v111 = vmul.f32 %v109, %v110
    %v112 = vmul.f32 %v108, %v110
    %v113 = vadd.f32 %v100, %v111
    %v114 = vadd.f32 %v101, %v112
    %115 = vrot.lane.b32.xlu0 %v109, 127
    %v116 = vpop.permute.xlu0 %115
    %117 = vrot.lane.b32.xlu0 %v108, 127
    %v118 = vpop.permute.xlu0 %117
    %v119 = vstv %s72
    %v120 = vmul.f32 %v116, %v119
    %v121 = vmul.f32 %v118, %v119
    %v122 = vadd.f32 %v113, %v120
    %v123 = vadd.f32 %v114, %v121
    %124 = vrot.lane.b32.xlu0 %v109, 126
    %v125 = vpop.permute.xlu0 %124
    %126 = vrot.lane.b32.xlu0 %v108, 126
    %v127 = vpop.permute.xlu0 %126
    %v128 = vstv %s73
    %v129 = vmul.f32 %v125, %v128
    %v130 = vmul.f32 %v127, %v128
    %v131 = vadd.f32 %v122, %v129
    %v132 = vadd.f32 %v123, %v130
    %v133 = vrot.slane %v78, 2
    %v134 = vrot.slane %v79, 2
    %v135 = vrot.slane %v80, 2
    %vm136 = vcmp.lt.s32.totalorder %v106, 6
    %v137 = vsel %vm136, %v134, %v135
    %v138 = vsel %vm136, %v133, %v134
    %v139 = vstv %s74
    %v140 = vmul.f32 %v138, %v139
    %v141 = vmul.f32 %v137, %v139
    %v142 = vadd.f32 %v131, %v140
    %v143 = vadd.f32 %v132, %v141
    %144 = vrot.lane.b32.xlu0 %v138, 127
    %v145 = vpop.permute.xlu0 %144
    %146 = vrot.lane.b32.xlu0 %v137, 127
    %v147 = vpop.permute.xlu0 %146
    %v148 = vstv %s75
    %v149 = vmul.f32 %v145, %v148
    %v150 = vmul.f32 %v147, %v148
    %v151 = vadd.f32 %v142, %v149
    %v152 = vadd.f32 %v143, %v150
    %153 = vrot.lane.b32.xlu0 %v138, 126
    %v154 = vpop.permute.xlu0 %153
    %155 = vrot.lane.b32.xlu0 %v137, 126
    %v156 = vpop.permute.xlu0 %155
    %v157 = vstv %s76
    %v158 = vmul.f32 %v154, %v157
    %v159 = vmul.f32 %v156, %v157
    %v160 = vadd.f32 %v151, %v158
    %v161 = vadd.f32 %v152, %v159
    %v162 = vstv %s77
    %v163 = vadd.f32 %v160, %v162
    %v164 = vadd.f32 %v161, %v162
    %165 = vst [vmem:[#allocation11] sm:$0xff] %v163
    %166 = vst [vmem:[#allocation11 + $0x8] sm:$0xff] %v164
    %v167 = vld [vmem:[#allocation4 + $0x10] sm:$0xff]
    %v168 = vld [vmem:[#allocation4 + $0x18] sm:$0xff]
    %169 = vst [vmem:[#allocation2] sm:$0xff] %v167
    %170 = vst [vmem:[#allocation2 + $0x8] sm:$0xff] %v168
    %v171 = vld [vmem:[#allocation8] sm:$0xff]
    %172 = vst [vmem:[#allocation2 + $0x10] sm:$0xff] %v171
    %v173 = vld [vmem:[#allocation2] sm:$0xff]
    %v174 = vld [vmem:[#allocation2 + $0x8] sm:$0xff]
    %v175 = vld [vmem:[#allocation2 + $0x10] sm:$0xff]
    %v176 = vmul.f32 %v173, %v81
    %v177 = vmul.f32 %v174, %v81
    %178 = vrot.lane.b32.xlu0 %v173, 127
    %v179 = vpop.permute.xlu0 %178
    %180 = vrot.lane.b32.xlu0 %v174, 127
    %v181 = vpop.permute.xlu0 %180
    %v182 = vmul.f32 %v179, %v88
    %v183 = vmul.f32 %v181, %v88
    %v184 = vadd.f32 %v176, %v182
    %v185 = vadd.f32 %v177, %v183
    %186 = vrot.lane.b32.xlu0 %v173, 126
    %v187 = vpop.permute.xlu0 %186
    %188 = vrot.lane.b32.xlu0 %v174, 126
    %v189 = vpop.permute.xlu0 %188
    %v190 = vmul.f32 %v187, %v97
    %v191 = vmul.f32 %v189, %v97
    %v192 = vadd.f32 %v184, %v190
    %v193 = vadd.f32 %v185, %v191
    %v194 = vrot.slane %v173, 1
    %v195 = vrot.slane %v174, 1
    %v196 = vrot.slane %v175, 1
    %v197 = vsel %vm107, %v195, %v196
    %v198 = vsel %vm107, %v194, %v195
    %v199 = vmul.f32 %v198, %v110
    %v200 = vmul.f32 %v197, %v110
    %v201 = vadd.f32 %v192, %v199
    %v202 = vadd.f32 %v193, %v200
    %203 = vrot.lane.b32.xlu0 %v198, 127
    %v204 = vpop.permute.xlu0 %203
    %205 = vrot.lane.b32.xlu0 %v197, 127
    %v206 = vpop.permute.xlu0 %205
    %v207 = vmul.f32 %v204, %v119
    %v208 = vmul.f32 %v206, %v119
    %v209 = vadd.f32 %v201, %v207
    %v210 = vadd.f32 %v202, %v208
    %211 = vrot.lane.b32.xlu0 %v198, 126
    %v212 = vpop.permute.xlu0 %211
    %213 = vrot.lane.b32.xlu0 %v197, 126
    %v214 = vpop.permute.xlu0 %213
    %v215 = vmul.f32 %v212, %v128
    %v216 = vmul.f32 %v214, %v128
    %v217 = vadd.f32 %v209, %v215
    %v218 = vadd.f32 %v210, %v216
    %v219 = vrot.slane %v173, 2
    %v220 = vrot.slane %v174, 2
    %v221 = vrot.slane %v175, 2
    %v222 = vsel %vm136, %v220, %v221
    %v223 = vsel %vm136, %v219, %v220
    %v224 = vmul.f32 %v223, %v139
    %v225 = vmul.f32 %v222, %v139
    %v226 = vadd.f32 %v217, %v224
    %v227 = vadd.f32 %v218, %v225
    %228 = vrot.lane.b32.xlu0 %v223, 127
    %v229 = vpop.permute.xlu0 %228
    %230 = vrot.lane.b32.xlu0 %v222, 127
    %v231 = vpop.permute.xlu0 %230
    %v232 = vmul.f32 %v229, %v148
    %v233 = vmul.f32 %v231, %v148
    %v234 = vadd.f32 %v226, %v232
    %v235 = vadd.f32 %v227, %v233
    %236 = vrot.lane.b32.xlu0 %v223, 126
    %v237 = vpop.permute.xlu0 %236
    %238 = vrot.lane.b32.xlu0 %v222, 126
    %v239 = vpop.permute.xlu0 %238
    %v240 = vmul.f32 %v237, %v157
    %v241 = vmul.f32 %v239, %v157
    %v242 = vadd.f32 %v234, %v240
    %v243 = vadd.f32 %v235, %v241
    %v244 = vadd.f32 %v242, %v162
    %v245 = vadd.f32 %v243, %v162
    %246 = vst [vmem:[#allocation11 + $0x10] sm:$0xff] %v244
    %247 = vst [vmem:[#allocation11 + $0x18] sm:$0xff] %v245
    // Predicated region
    $region30: #{tpu_custom_call.1} parent=1 // pred_check
      _
    $region31: #{tpu_custom_call.1} parent=1 // pred_check_branch
      %249 = sbr.rel (0) target = $region33
    $region32: #{tpu_custom_call.1} parent=1 // pred_region
      %s251 = ssub.s32 512, 384
      %252 = vsyncadd [#allocation6], %s251
      %s253 = sshll.u32 [#allocation11], 4
      %s254 = int_to_ptr.vmem [resolvable:$true] %s253
      %259 = dma.vmem_to_hbm [thread:$0]  %s254, 384, %s4, [#allocation6], 128, 128, 8
    $region33: #{tpu_custom_call.1} parent=1 // pred_fallthru
      _
    // Predicated region
    $region34: #{tpu_custom_call.1} parent=1 // pred_check
      _
    $region35: #{tpu_custom_call.1} parent=1 // pred_check_branch
      %261 = sbr.rel (0) target = $region37
    $region36: #{tpu_custom_call.1} parent=1 // pred_region
      %262 = dma.done [#allocation6], 512
    $region37: #{tpu_custom_call.1} parent=1 // pred_fallthru
      _
    %263 = vsyncpa [#allocation5], 1
    %264 = vsyncpa [#allocation9], 1
    %265 = vsyncpa [#allocation6], 1
    %266 = vsyncpa [#allocation7], 1

</llo_original>
